<compile_context>
chip_gen: v7x
topology: tpu7x:2x2x1
jax: 0.10.0
libtpu: 0.0.40
codegen_flags: <defaults>
</compile_context>

<pallas_src>
import jax
import jax.numpy as jnp
from jax.experimental import pallas as pl
from jax.experimental.pallas import tpu as pltpu


Y_DIM = 14
HIDDEN = 32
NUM_LATENTS = 15

_BR_MAX = 2048     # row tile (lane axis); sized for v7x's 64 MiB VMEM with big margin
_LANE = 128


def _round_up(x, m):
    return ((x + m - 1) // m) * m


def _softplus(x):
    # numerically stable softplus: log1p(exp(-|x|)) + max(x, 0)
    return jnp.log1p(jnp.exp(-jnp.abs(x))) + jnp.maximum(x, 0.0)


def mujoco_encoder_kernel(y_ref, w1t_ref, b1_ref,
                          w2at_ref, b2a_ref, w2bt_ref, b2b_ref,
                          mean_ref, std_ref):
    """Fused MLP + natural-parameter head, rows-on-lanes layout.

    y_ref    : (14, BR)   input tile (rows on lanes)
    w1t_ref  : (32, 14)   W1^T          b1_ref  : (32, 1)
    w2at_ref : (15, 32)   W2[:, :15]^T  b2a_ref : (15, 1)
    w2bt_ref : (15, 32)   W2[:, 15:]^T  b2b_ref : (15, 1)
    outputs  : (15, BR)
    """
    y = y_ref[...]                                                  # (14, BR)
    h = jnp.dot(w1t_ref[...], y, preferred_element_type=jnp.float32)
    h = jnp.maximum(h + b1_ref[...], 0.0)                           # (32, BR)

    # two aligned dots instead of one 30-wide dot + mid-tile slice
    lam1 = jnp.dot(w2at_ref[...], h,
                   preferred_element_type=jnp.float32) + b2a_ref[...]   # (15, BR)
    lam2_pre = jnp.dot(w2bt_ref[...], h,
                       preferred_element_type=jnp.float32) + b2b_ref[...]
    lam2_inv = -_softplus(lam2_pre)                                 # (15, BR), <= 0

    mean_ref[...] = lam1 * lam2_inv
    std_ref[...] = jnp.sqrt(-0.5 * lam2_inv)


def mujoco_encoder(y_batch, params):
    """y_batch: [..., t, 14]  ->  (q_means, q_stds) each [..., t, 15]."""
    w1, b1, w2, b2 = params            # w1:(14,32) b1:(32,) w2:(32,30) b2:(30,)
    lead_shape = y_batch.shape[:-1]
    rows = 1
    for d in lead_shape:
        rows *= d

    # ---- layout plumbing (wrapper side): pad rows, put rows on the lane axis ----
    br = min(_BR_MAX, _round_up(max(rows, 1), _LANE))
    rows_p = _round_up(rows, br)
    y2d = y_batch.reshape(rows, Y_DIM).astype(jnp.float32)
    y_t = jnp.pad(y2d, ((0, rows_p - rows), (0, 0))).T              # (14, rows_p)

    w1t = w1.T                                                      # (32, 14)
    b1c = b1.reshape(HIDDEN, 1)
    w2a_t = w2[:, :NUM_LATENTS].T                                   # (15, 32)
    w2b_t = w2[:, NUM_LATENTS:].T                                   # (15, 32)
    b2a = b2[:NUM_LATENTS].reshape(NUM_LATENTS, 1)
    b2b = b2[NUM_LATENTS:].reshape(NUM_LATENTS, 1)

    grid = (rows_p // br,)

    def resident(shape):
        return pl.BlockSpec(shape, lambda i: (0, 0))

    mean_t, std_t = pl.pallas_call(
        mujoco_encoder_kernel,
        out_shape=(
            jax.ShapeDtypeStruct((NUM_LATENTS, rows_p), jnp.float32),
            jax.ShapeDtypeStruct((NUM_LATENTS, rows_p), jnp.float32),
        ),
        grid_spec=pltpu.PrefetchScalarGridSpec(
            num_scalar_prefetch=0,
            grid=grid,
            in_specs=[
                pl.BlockSpec((Y_DIM, br), lambda i: (0, i)),        # streaming input
                resident((HIDDEN, Y_DIM)),                          # W1^T
                resident((HIDDEN, 1)),                              # b1
                resident((NUM_LATENTS, HIDDEN)),                    # W2a^T
                resident((NUM_LATENTS, 1)),                         # b2a
                resident((NUM_LATENTS, HIDDEN)),                    # W2b^T
                resident((NUM_LATENTS, 1)),                         # b2b
            ],
            out_specs=(
                pl.BlockSpec((NUM_LATENTS, br), lambda i: (0, i)),
                pl.BlockSpec((NUM_LATENTS, br), lambda i: (0, i)),
            ),
        ),
        compiler_params=pltpu.CompilerParams(
            dimension_semantics=("parallel",),     # shard row loop across TCs on v7x
            vmem_limit_bytes=32 * 1024 * 1024,
        ),
    )(y_t, w1t, b1c, w2a_t, b2a, w2b_t, b2b)

    q_means = mean_t.T[:rows].reshape(*lead_shape, NUM_LATENTS)
    q_stds = std_t.T[:rows].reshape(*lead_shape, NUM_LATENTS)
    return q_means, q_stds


def init_params(key):
    """Deterministic Xavier-normal weights, zero biases (as in the module)."""
    k1, k2 = jax.random.split(key)
    std1 = (2.0 / (Y_DIM + HIDDEN)) ** 0.5
    std2 = (2.0 / (HIDDEN + 2 * NUM_LATENTS)) ** 0.5
    w1 = std1 * jax.random.normal(k1, (Y_DIM, HIDDEN), jnp.float32)
    b1 = jnp.zeros((HIDDEN,), jnp.float32)
    w2 = std2 * jax.random.normal(k2, (HIDDEN, 2 * NUM_LATENTS), jnp.float32)
    b2 = jnp.zeros((2 * NUM_LATENTS,), jnp.float32)
    return w1, b1, w2, b2


if __name__ == "__main__":
    key = jax.random.PRNGKey(0)
    pkey, xkey = jax.random.split(key)
    params = init_params(pkey)

    # y_batch: [n, t, 14]   (small shapes: n=2, t=8)
    y_batch = jax.random.normal(xkey, (2, 8, Y_DIM), jnp.float32)

    q_means, q_stds = mujoco_encoder(y_batch, params)
    jax.block_until_ready((q_means, q_stds))

    # pure-JAX reference check
    w1, b1, w2, b2 = params
    h = jnp.maximum(y_batch @ w1 + b1, 0.0)
    x = h @ w2 + b2
    lam1 = x[..., :NUM_LATENTS]
    lam2_inv = -jax.nn.softplus(x[..., NUM_LATENTS:])
    ref_means = lam1 * lam2_inv
    ref_stds = jnp.sqrt(-0.5 * lam2_inv)
    assert jnp.allclose(q_means, ref_means, atol=1e-4, rtol=1e-4)
    assert jnp.allclose(q_stds, ref_stds, atol=1e-4, rtol=1e-4)

    print("KERNEL_OK")
</pallas_src>

<mosaic_0001>
module attributes {stable_mosaic.version = 11 : i64} {
  func.func @mujoco_encoder_kernel(%arg0: i32, %arg1: memref<14x128xf32, #tpu.memory_space<vmem>>, %arg2: memref<32x14xf32, #tpu.memory_space<vmem>>, %arg3: memref<32x1xf32, #tpu.memory_space<vmem>>, %arg4: memref<15x32xf32, #tpu.memory_space<vmem>>, %arg5: memref<15x1xf32, #tpu.memory_space<vmem>>, %arg6: memref<15x32xf32, #tpu.memory_space<vmem>>, %arg7: memref<15x1xf32, #tpu.memory_space<vmem>>, %arg8: memref<15x128xf32, #tpu.memory_space<vmem>>, %arg9: memref<15x128xf32, #tpu.memory_space<vmem>>) attributes {dimension_semantics = [#tpu.dimension_semantics<parallel>], iteration_bounds = array<i64: 1>, scalar_prefetch = 0 : i64, scratch_operands = 0 : i64, tpu.core_type = #tpu.core_type<tc>, window_params = [{transform_indices = @transform_0, window_bounds = array<i64: 14, 128>}, {pipeline_mode = #tpu.pipeline_mode<synchronous>, transform_indices = @transform_1, window_bounds = array<i64: 32, 14>}, {pipeline_mode = #tpu.pipeline_mode<synchronous>, transform_indices = @transform_2, window_bounds = array<i64: 32, 1>}, {pipeline_mode = #tpu.pipeline_mode<synchronous>, transform_indices = @transform_3, window_bounds = array<i64: 15, 32>}, {pipeline_mode = #tpu.pipeline_mode<synchronous>, transform_indices = @transform_4, window_bounds = array<i64: 15, 1>}, {pipeline_mode = #tpu.pipeline_mode<synchronous>, transform_indices = @transform_5, window_bounds = array<i64: 15, 32>}, {pipeline_mode = #tpu.pipeline_mode<synchronous>, transform_indices = @transform_6, window_bounds = array<i64: 15, 1>}, {transform_indices = @transform_7, window_bounds = array<i64: 15, 128>}, {transform_indices = @transform_8, window_bounds = array<i64: 15, 128>}]} {
    %c0 = arith.constant 0 : index
    %c0_0 = arith.constant 0 : index
    %0 = vector.load %arg1[%c0, %c0_0] : memref<14x128xf32, #tpu.memory_space<vmem>>, vector<14x128xf32>
    %c0_1 = arith.constant 0 : index
    %c0_2 = arith.constant 0 : index
    %1 = vector.load %arg2[%c0_1, %c0_2] : memref<32x14xf32, #tpu.memory_space<vmem>>, vector<32x14xf32>
    %cst = arith.constant dense<0.000000e+00> : vector<32x128xf32>
    %2 = tpu.matmul %1, %0, %cst {dimension_numbers = #tpu.dot_dimension_numbers<[1], [0], [0], [1], [0, 0, 1, 1], [], []>} : vector<32x14xf32>, vector<14x128xf32>, vector<32x128xf32> -> vector<32x128xf32>
    %c0_3 = arith.constant 0 : index
    %c0_4 = arith.constant 0 : index
    %3 = vector.load %arg3[%c0_3, %c0_4] : memref<32x1xf32, #tpu.memory_space<vmem>>, vector<32x1xf32>
    %4 = vector.broadcast %3 : vector<32x1xf32> to vector<32x128xf32>
    %5 = arith.addf %2, %4 : vector<32x128xf32>
    %cst_5 = arith.constant 0.000000e+00 : f32
    %6 = vector.broadcast %cst_5 : f32 to vector<32x128xf32>
    %7 = arith.maximumf %5, %6 : vector<32x128xf32>
    %c0_6 = arith.constant 0 : index
    %c0_7 = arith.constant 0 : index
    %8 = vector.load %arg4[%c0_6, %c0_7] : memref<15x32xf32, #tpu.memory_space<vmem>>, vector<15x32xf32>
    %cst_8 = arith.constant dense<0.000000e+00> : vector<15x128xf32>
    %9 = tpu.matmul %8, %7, %cst_8 {dimension_numbers = #tpu.dot_dimension_numbers<[1], [0], [0], [1], [0, 0, 1, 1], [], []>} : vector<15x32xf32>, vector<32x128xf32>, vector<15x128xf32> -> vector<15x128xf32>
    %c0_9 = arith.constant 0 : index
    %c0_10 = arith.constant 0 : index
    %10 = vector.load %arg5[%c0_9, %c0_10] : memref<15x1xf32, #tpu.memory_space<vmem>>, vector<15x1xf32>
    %11 = vector.broadcast %10 : vector<15x1xf32> to vector<15x128xf32>
    %12 = arith.addf %9, %11 : vector<15x128xf32>
    %c0_11 = arith.constant 0 : index
    %c0_12 = arith.constant 0 : index
    %13 = vector.load %arg6[%c0_11, %c0_12] : memref<15x32xf32, #tpu.memory_space<vmem>>, vector<15x32xf32>
    %cst_13 = arith.constant dense<0.000000e+00> : vector<15x128xf32>
    %14 = tpu.matmul %13, %7, %cst_13 {dimension_numbers = #tpu.dot_dimension_numbers<[1], [0], [0], [1], [0, 0, 1, 1], [], []>} : vector<15x32xf32>, vector<32x128xf32>, vector<15x128xf32> -> vector<15x128xf32>
    %c0_14 = arith.constant 0 : index
    %c0_15 = arith.constant 0 : index
    %15 = vector.load %arg7[%c0_14, %c0_15] : memref<15x1xf32, #tpu.memory_space<vmem>>, vector<15x1xf32>
    %16 = vector.broadcast %15 : vector<15x1xf32> to vector<15x128xf32>
    %17 = arith.addf %14, %16 : vector<15x128xf32>
    %18 = math.absf %17 : vector<15x128xf32>
    %cst_16 = arith.constant 0.000000e+00 : f32
    %19 = vector.broadcast %cst_16 : f32 to vector<15x128xf32>
    %20 = arith.subf %19, %18 : vector<15x128xf32>
    %21 = math.exp %20 : vector<15x128xf32>
    %22 = math.log1p %21 : vector<15x128xf32>
    %cst_17 = arith.constant 0.000000e+00 : f32
    %23 = vector.broadcast %cst_17 : f32 to vector<15x128xf32>
    %24 = arith.maximumf %17, %23 : vector<15x128xf32>
    %25 = arith.addf %22, %24 : vector<15x128xf32>
    %cst_18 = arith.constant 0.000000e+00 : f32
    %26 = vector.broadcast %cst_18 : f32 to vector<15x128xf32>
    %27 = arith.subf %26, %25 : vector<15x128xf32>
    %28 = arith.mulf %12, %27 : vector<15x128xf32>
    %c0_19 = arith.constant 0 : index
    %c0_20 = arith.constant 0 : index
    %29 = vector.load %arg8[%c0_19, %c0_20] : memref<15x128xf32, #tpu.memory_space<vmem>>, vector<15x128xf32>
    tpu.vector_store %arg8[%c0_19, %c0_20], %28 {strides = array<i32>} : memref<15x128xf32, #tpu.memory_space<vmem>>, vector<15x128xf32>,
    %cst_21 = arith.constant -5.000000e-01 : f32
    %30 = vector.broadcast %cst_21 : f32 to vector<15x128xf32>
    %31 = arith.mulf %30, %27 : vector<15x128xf32>
    %32 = math.sqrt %31 : vector<15x128xf32>
    %c0_22 = arith.constant 0 : index
    %c0_23 = arith.constant 0 : index
    %33 = vector.load %arg9[%c0_22, %c0_23] : memref<15x128xf32, #tpu.memory_space<vmem>>, vector<15x128xf32>
    tpu.vector_store %arg9[%c0_22, %c0_23], %32 {strides = array<i32>} : memref<15x128xf32, #tpu.memory_space<vmem>>, vector<15x128xf32>,
    return
  }
  func.func @transform_0(%arg0: i32) -> (i32, i32) {
    %c0_i32 = arith.constant 0 : i32
    %c0_i32_0 = arith.constant 0 : i32
    return %c0_i32, %arg0 : i32, i32
  }
  func.func @transform_1(%arg0: i32) -> (i32, i32) {
    %c0_i32 = arith.constant 0 : i32
    %c0_i32_0 = arith.constant 0 : i32
    %c0_i32_1 = arith.constant 0 : i32
    return %c0_i32, %c0_i32_0 : i32, i32
  }
  func.func @transform_2(%arg0: i32) -> (i32, i32) {
    %c0_i32 = arith.constant 0 : i32
    %c0_i32_0 = arith.constant 0 : i32
    %c0_i32_1 = arith.constant 0 : i32
    return %c0_i32, %c0_i32_0 : i32, i32
  }
  func.func @transform_3(%arg0: i32) -> (i32, i32) {
    %c0_i32 = arith.constant 0 : i32
    %c0_i32_0 = arith.constant 0 : i32
    %c0_i32_1 = arith.constant 0 : i32
    return %c0_i32, %c0_i32_0 : i32, i32
  }
  func.func @transform_4(%arg0: i32) -> (i32, i32) {
    %c0_i32 = arith.constant 0 : i32
    %c0_i32_0 = arith.constant 0 : i32
    %c0_i32_1 = arith.constant 0 : i32
    return %c0_i32, %c0_i32_0 : i32, i32
  }
  func.func @transform_5(%arg0: i32) -> (i32, i32) {
    %c0_i32 = arith.constant 0 : i32
    %c0_i32_0 = arith.constant 0 : i32
    %c0_i32_1 = arith.constant 0 : i32
    return %c0_i32, %c0_i32_0 : i32, i32
  }
  func.func @transform_6(%arg0: i32) -> (i32, i32) {
    %c0_i32 = arith.constant 0 : i32
    %c0_i32_0 = arith.constant 0 : i32
    %c0_i32_1 = arith.constant 0 : i32
    return %c0_i32, %c0_i32_0 : i32, i32
  }
  func.func @transform_7(%arg0: i32) -> (i32, i32) {
    %c0_i32 = arith.constant 0 : i32
    %c0_i32_0 = arith.constant 0 : i32
    return %c0_i32, %arg0 : i32, i32
  }
  func.func @transform_8(%arg0: i32) -> (i32, i32) {
    %c0_i32 = arith.constant 0 : i32
    %c0_i32_0 = arith.constant 0 : i32
    return %c0_i32, %arg0 : i32, i32
  }
}

</mosaic_0001>

<llo_original>
// kernel: tpu_custom_call.1
$region0: #{tpu_custom_call.1}
  #allocation0 [shape = 'u32[]', space=smem, size = 0x4, offset = 0x4, fixed_abs, tag = 'smem constant byte address 0x4 - core index']
  #allocation1 [shape = 'u32[144,128]{1,0:T(1,128)}', space=vmem, size = 0x12000, scoped, tag = 'internal scratch']
  %s0 = inlined_call_operand.vmem [shape: f32[14,128], index: 0, kind: input, shape index: {}]
  %s1 = inlined_call_operand.vmem [shape: f32[32,14], index: 1, kind: input, shape index: {}]
  %s2 = inlined_call_operand.vmem [shape: f32[32,1], index: 2, kind: input, shape index: {}]
  %s3 = inlined_call_operand.vmem [shape: f32[15,32], index: 3, kind: input, shape index: {}]
  %s4 = inlined_call_operand.vmem [shape: f32[15,1], index: 4, kind: input, shape index: {}]
  %s5 = inlined_call_operand.vmem [shape: f32[15,32], index: 5, kind: input, shape index: {}]
  %s6 = inlined_call_operand.vmem [shape: f32[15,1], index: 6, kind: input, shape index: {}]
  %s7 = inlined_call_operand.hbm [shape: f32[15,128], index: 7, kind: output, shape index: {0}]
  %s8 = inlined_call_operand.hbm [shape: f32[15,128], index: 8, kind: output, shape index: {1}]
  %9 = xla_tuple %s7, %s8
  %s10 = sld [smem:[#allocation0]]
  $region46: #{tpu_custom_call.1} parent=0
    _
  %s12 = ssub.s32 1, %s10
  %s13 = scalar_select 0, %s12, %s10
  $region1: #{tpu_custom_call.1} parent=0
    #allocation2 [shape = 'u8[8192]{0}', space=vmem, size = 0x2000, scoped, tag = 'output window, operand 0, single buffered']
    #allocation3 [shape = 's32[1]{0}', space=sflag, size = 0x4, scoped, tag = 'scoped memory for tpu_custom_call.1']
    #allocation4 [shape = 'u8[8192]{0}', space=vmem, size = 0x2000, scoped, tag = 'output window, operand 1, single buffered']
    #allocation5 [shape = 's32[1]{0}', space=sflag, size = 0x4, scoped, tag = 'scoped memory for tpu_custom_call.1']
    %14 = vsyncpa [#allocation3], 0
    %15 = vsyncpa [#allocation5], 0
    // Predicated region
    $region2: #{tpu_custom_call.1} parent=1 // pred_check
      _
    $region3: #{tpu_custom_call.1} parent=1 // pred_check_branch
      %17 = sbr.rel (0) target = $region5
    $region4: #{tpu_custom_call.1} parent=1 // pred_region
      _
    $region5: #{tpu_custom_call.1} parent=1 // pred_fallthru
      _
    // Predicated region
    $region6: #{tpu_custom_call.1} parent=1 // pred_check
      _
    $region7: #{tpu_custom_call.1} parent=1 // pred_check_branch
      %19 = sbr.rel (0) target = $region9
    $region8: #{tpu_custom_call.1} parent=1 // pred_region
      _
    $region9: #{tpu_custom_call.1} parent=1 // pred_fallthru
      _
    // Predicated region
    $region10: #{tpu_custom_call.1} parent=1 // pred_check
      _
    $region11: #{tpu_custom_call.1} parent=1 // pred_check_branch
      %21 = sbr.rel (0) target = $region13
    $region12: #{tpu_custom_call.1} parent=1 // pred_region
      _
    $region13: #{tpu_custom_call.1} parent=1 // pred_fallthru
      _
    // Predicated region
    $region14: #{tpu_custom_call.1} parent=1 // pred_check
      _
    $region15: #{tpu_custom_call.1} parent=1 // pred_check_branch
      %23 = sbr.rel (0) target = $region17
    $region16: #{tpu_custom_call.1} parent=1 // pred_region
      _
    $region17: #{tpu_custom_call.1} parent=1 // pred_fallthru
      _
    // Predicated region
    $region18: #{tpu_custom_call.1} parent=1 // pred_check
      _
    $region19: #{tpu_custom_call.1} parent=1 // pred_check_branch
      %25 = sbr.rel (0) target = $region21
    $region20: #{tpu_custom_call.1} parent=1 // pred_region
      _
    $region21: #{tpu_custom_call.1} parent=1 // pred_fallthru
      _
    // Predicated region
    $region22: #{tpu_custom_call.1} parent=1 // pred_check
      _
    $region23: #{tpu_custom_call.1} parent=1 // pred_check_branch
      %27 = sbr.rel (0) target = $region25
    $region24: #{tpu_custom_call.1} parent=1 // pred_region
      _
    $region25: #{tpu_custom_call.1} parent=1 // pred_fallthru
      _
    // Predicated region
    $region26: #{tpu_custom_call.1} parent=1 // pred_check
      _
    $region27: #{tpu_custom_call.1} parent=1 // pred_check_branch
      %29 = sbr.rel (0) target = $region29
    $region28: #{tpu_custom_call.1} parent=1 // pred_region
      _
    $region29: #{tpu_custom_call.1} parent=1 // pred_fallthru
      _
    %v30 = vld [vmem:[%s0] sm:$0xff]
    %v31 = vld [vmem:[%s0 + $0x8] sm:$0x3f]
    %v32 = vld [vmem:[%s1] sm:$0xff]
    %v33 = vld [vmem:[%s1 + $0x8] sm:$0xff]
    %v34 = vld [vmem:[%s1 + $0x10] sm:$0xff]
    %v35 = vld [vmem:[%s1 + $0x18] sm:$0xff]
    %v36 = vld [vmem:[%s2] sm:$0xff]
    %v37 = vld [vmem:[%s2 + $0x8] sm:$0xff]
    %v38 = vld [vmem:[%s2 + $0x10] sm:$0xff]
    %v39 = vld [vmem:[%s2 + $0x18] sm:$0xff]
    %41 = vset.pattern.permute.xlu0 0
    %42 = vperm.xlu0 %41, %v36
    %v43 = vpop.permute.xlu0 %42
    %46 = vset.pattern.permute.xlu0 0
    %47 = vperm.xlu0 %46, %v37
    %v48 = vpop.permute.xlu0 %47
    %51 = vset.pattern.permute.xlu0 0
    %52 = vperm.xlu0 %51, %v38
    %v53 = vpop.permute.xlu0 %52
    %56 = vset.pattern.permute.xlu0 0
    %57 = vperm.xlu0 %56, %v39
    %v58 = vpop.permute.xlu0 %57
    %vm60 = vcmask 113664
    %v62 = vsel %vm60, %v32, 0
    %v65 = vsel %vm60, %v33, 0
    %v68 = vsel %vm60, %v34, 0
    %v71 = vsel %vm60, %v35, 0
    %vm73 = vcmask 1045504
    %v75 = vsel %vm73, %v31, 0
    %77 = vmatprep.subr.mxu0 0.0
    %78 = vmatpush1.msra.mxu0 %v30
    %79 = vmatprep.subr.mxu0 0.0
    %80 = vmatpush1.msra.mxu0 %v75
    %81 = vmatprep.subr.mxu0 0.0
    %82 = vmatpush1.msra.mxu0 0.0
    %83 = vmatprep.subr.mxu0 0.0
    %84 = vmatpush1.msra.mxu0 0.0
    %85 = vmatprep.subr.mxu0 0.0
    %86 = vmatpush1.msra.mxu0 0.0
    %87 = vmatprep.subr.mxu0 0.0
    %88 = vmatpush1.msra.mxu0 0.0
    %89 = vmatprep.subr.mxu0 0.0
    %90 = vmatpush1.msra.mxu0 0.0
    %91 = vmatprep.subr.mxu0 0.0
    %92 = vmatpush1.msra.mxu0 0.0
    %93 = vmatprep.subr.mxu0 0.0
    %94 = vmatpush1.msra.mxu0 0.0
    %95 = vmatprep.subr.mxu0 0.0
    %96 = vmatpush1.msra.mxu0 0.0
    %97 = vmatprep.subr.mxu0 0.0
    %98 = vmatpush1.msra.mxu0 0.0
    %99 = vmatprep.subr.mxu0 0.0
    %100 = vmatpush1.msra.mxu0 0.0
    %101 = vmatprep.subr.mxu0 0.0
    %102 = vmatpush1.msra.mxu0 0.0
    %103 = vmatprep.subr.mxu0 0.0
    %104 = vmatpush1.msra.mxu0 0.0
    %105 = vmatprep.subr.mxu0 0.0
    %106 = vmatpush1.msra.mxu0 0.0
    %107 = vmatprep.subr.mxu0 0.0
    %108 = vmatpush1.msra.mxu0 0.0
    %109 = vmatprep.subr.mxu0 0.0
    %110 = vmatpush1.msra.mxu0 0.0
    %111 = vmatprep.subr.mxu0 0.0
    %112 = vmatpush1.msra.mxu0 0.0
    %113 = vmatprep.subr.mxu0 0.0
    %114 = vmatpush1.msra.mxu0 0.0
    %115 = vmatprep.subr.mxu0 0.0
    %116 = vmatpush1.msra.mxu0 0.0
    %117 = vmatprep.subr.mxu0 0.0
    %118 = vmatpush1.msra.mxu0 0.0
    %119 = vmatprep.subr.mxu0 0.0
    %120 = vmatpush1.msra.mxu0 0.0
    %121 = vmatprep.subr.mxu0 0.0
    %122 = vmatpush1.msra.mxu0 0.0
    %123 = vmatprep.subr.mxu0 0.0
    %124 = vmatpush1.msra.mxu0 0.0
    %125 = vmatprep.subr.mxu0 0.0
    %126 = vmatpush1.msra.mxu0 0.0
    %127 = vmatprep.subr.mxu0 0.0
    %128 = vmatpush1.msra.mxu0 0.0
    %129 = vmatprep.subr.mxu0 0.0
    %130 = vmatpush1.msra.mxu0 0.0
    %131 = vmatprep.subr.mxu0 0.0
    %132 = vmatpush1.msra.mxu0 0.0
    %133 = vmatprep.subr.mxu0 0.0
    %134 = vmatpush1.msra.mxu0 0.0
    %135 = vmatprep.subr.mxu0 0.0
    %136 = vmatpush1.msra.mxu0 0.0
    %137 = vmatprep.subr.mxu0 0.0
    %138 = vmatpush1.msra.mxu0 0.0
    %139 = vmatprep.subr.mxu0 0.0
    %140 = vmatpush1.msra.mxu0 0.0
    %141 = vmatprep.mubr.f32.mxu0 0.0
    %142 = vmatmul.mubr.f32.gmra.mrb[0].mxu0 %v62
    %v143 = vpop.f32.mrb[0].mxu0
    %v144 = vadd.f32 %v43, %v143
    %v145 = vpop.f32.mrb[0].mxu0
    %146 = vmatprep.mubr.f32.mxu0 0.0
    %147 = vmatmul.mubr.f32.gmra.mrb[0].mxu0 %v65
    %v148 = vpop.f32.mrb[0].mxu0
    %v149 = vadd.f32 %v48, %v148
    %v150 = vpop.f32.mrb[0].mxu0
    %151 = vmatprep.mubr.f32.mxu0 0.0
    %152 = vmatmul.mubr.f32.gmra.mrb[0].mxu0 %v68
    %v153 = vpop.f32.mrb[0].mxu0
    %v154 = vadd.f32 %v53, %v153
    %v155 = vpop.f32.mrb[0].mxu0
    %156 = vmatprep.mubr.f32.mxu0 0.0
    %157 = vmatmul.mubr.f32.gmra.mrb[0].mxu0 %v71
    %v158 = vpop.f32.mrb[0].mxu0
    %v159 = vadd.f32 %v58, %v158
    %v160 = vpop.f32.mrb[0].mxu0
    %161 = vdwg.mxu0
    %v162 = vmax.f32 %v144, 0.0
    %v163 = vmax.f32 %v149, 0.0
    %v164 = vmax.f32 %v154, 0.0
    %v165 = vmax.f32 %v159, 0.0
    %v166 = vld [vmem:[%s3] sm:$0xff]
    %v167 = vld [vmem:[%s3 + $0x8] sm:$0x7f]
    %v168 = vld [vmem:[%s4] sm:$0xff]
    %v169 = vld [vmem:[%s4 + $0x8] sm:$0x7f]
    %171 = vset.pattern.permute.xlu0 0
    %172 = vperm.xlu0 %171, %v168
    %v173 = vpop.permute.xlu0 %172
    %176 = vset.pattern.permute.xlu0 0
    %177 = vperm.xlu0 %176, %v169
    %v178 = vpop.permute.xlu0 %177
    %vm180 = vcmask 261120
    %v182 = vsel %vm180, %v166, 0
    %v185 = vsel %vm180, %v167, 0
    %187 = vmatprep.subr.mxu0 0.0
    %188 = vmatpush1.msra.mxu0 %v162
    %189 = vmatprep.subr.mxu0 0.0
    %190 = vmatpush1.msra.mxu0 %v163
    %191 = vmatprep.subr.mxu0 0.0
    %192 = vmatpush1.msra.mxu0 %v164
    %193 = vmatprep.subr.mxu0 0.0
    %194 = vmatpush1.msra.mxu0 %v165
    %195 = vmatprep.subr.mxu0 0.0
    %196 = vmatpush1.msra.mxu0 0.0
    %197 = vmatprep.subr.mxu0 0.0
    %198 = vmatpush1.msra.mxu0 0.0
    %199 = vmatprep.subr.mxu0 0.0
    %200 = vmatpush1.msra.mxu0 0.0
    %201 = vmatprep.subr.mxu0 0.0
    %202 = vmatpush1.msra.mxu0 0.0
    %203 = vmatprep.subr.mxu0 0.0
    %204 = vmatpush1.msra.mxu0 0.0
    %205 = vmatprep.subr.mxu0 0.0
    %206 = vmatpush1.msra.mxu0 0.0
    %207 = vmatprep.subr.mxu0 0.0
    %208 = vmatpush1.msra.mxu0 0.0
    %209 = vmatprep.subr.mxu0 0.0
    %210 = vmatpush1.msra.mxu0 0.0
    %211 = vmatprep.subr.mxu0 0.0
    %212 = vmatpush1.msra.mxu0 0.0
    %213 = vmatprep.subr.mxu0 0.0
    %214 = vmatpush1.msra.mxu0 0.0
    %215 = vmatprep.subr.mxu0 0.0
    %216 = vmatpush1.msra.mxu0 0.0
    %217 = vmatprep.subr.mxu0 0.0
    %218 = vmatpush1.msra.mxu0 0.0
    %219 = vmatprep.subr.mxu0 0.0
    %220 = vmatpush1.msra.mxu0 0.0
    %221 = vmatprep.subr.mxu0 0.0
    %222 = vmatpush1.msra.mxu0 0.0
    %223 = vmatprep.subr.mxu0 0.0
    %224 = vmatpush1.msra.mxu0 0.0
    %225 = vmatprep.subr.mxu0 0.0
    %226 = vmatpush1.msra.mxu0 0.0
    %227 = vmatprep.subr.mxu0 0.0
    %228 = vmatpush1.msra.mxu0 0.0
    %229 = vmatprep.subr.mxu0 0.0
    %230 = vmatpush1.msra.mxu0 0.0
    %231 = vmatprep.subr.mxu0 0.0
    %232 = vmatpush1.msra.mxu0 0.0
    %233 = vmatprep.subr.mxu0 0.0
    %234 = vmatpush1.msra.mxu0 0.0
    %235 = vmatprep.subr.mxu0 0.0
    %236 = vmatpush1.msra.mxu0 0.0
    %237 = vmatprep.subr.mxu0 0.0
    %238 = vmatpush1.msra.mxu0 0.0
    %239 = vmatprep.subr.mxu0 0.0
    %240 = vmatpush1.msra.mxu0 0.0
    %241 = vmatprep.subr.mxu0 0.0
    %242 = vmatpush1.msra.mxu0 0.0
    %243 = vmatprep.subr.mxu0 0.0
    %244 = vmatpush1.msra.mxu0 0.0
    %245 = vmatprep.subr.mxu0 0.0
    %246 = vmatpush1.msra.mxu0 0.0
    %247 = vmatprep.subr.mxu0 0.0
    %248 = vmatpush1.msra.mxu0 0.0
    %249 = vmatprep.subr.mxu0 0.0
    %250 = vmatpush1.msra.mxu0 0.0
    %251 = vmatprep.mubr.f32.mxu0 0.0
    %252 = vmatmul.mubr.f32.gmra.mrb[0].mxu0 %v182
    %v253 = vpop.f32.mrb[0].mxu0
    %v254 = vadd.f32 %v173, %v253
    %v255 = vpop.f32.mrb[0].mxu0
    %256 = vmatprep.mubr.f32.mxu0 0.0
    %257 = vmatmul.mubr.f32.gmra.mrb[0].mxu0 %v185
    %v258 = vpop.f32.mrb[0].mxu0
    %v259 = vadd.f32 %v178, %v258
    %v260 = vpop.f32.mrb[0].mxu0
    %261 = vdwg.mxu0
    %v262 = vld [vmem:[%s5] sm:$0xff]
    %v263 = vld [vmem:[%s5 + $0x8] sm:$0x7f]
    %v264 = vld [vmem:[%s6] sm:$0xff]
    %v265 = vld [vmem:[%s6 + $0x8] sm:$0x7f]
    %267 = vset.pattern.permute.xlu0 0
    %268 = vperm.xlu0 %267, %v264
    %v269 = vpop.permute.xlu0 %268
    %272 = vset.pattern.permute.xlu0 0
    %273 = vperm.xlu0 %272, %v265
    %v274 = vpop.permute.xlu0 %273
    %v277 = vsel %vm180, %v262, 0
    %v280 = vsel %vm180, %v263, 0
    %282 = vmatprep.subr.mxu0 0.0
    %283 = vmatpush1.msra.mxu0 %v162
    %284 = vmatprep.subr.mxu0 0.0
    %285 = vmatpush1.msra.mxu0 %v163
    %286 = vmatprep.subr.mxu0 0.0
    %287 = vmatpush1.msra.mxu0 %v164
    %288 = vmatprep.subr.mxu0 0.0
    %289 = vmatpush1.msra.mxu0 %v165
    %290 = vmatprep.subr.mxu0 0.0
    %291 = vmatpush1.msra.mxu0 0.0
    %292 = vmatprep.subr.mxu0 0.0
    %293 = vmatpush1.msra.mxu0 0.0
    %294 = vmatprep.subr.mxu0 0.0
    %295 = vmatpush1.msra.mxu0 0.0
    %296 = vmatprep.subr.mxu0 0.0
    %297 = vmatpush1.msra.mxu0 0.0
    %298 = vmatprep.subr.mxu0 0.0
    %299 = vmatpush1.msra.mxu0 0.0
    %300 = vmatprep.subr.mxu0 0.0
    %301 = vmatpush1.msra.mxu0 0.0
    %302 = vmatprep.subr.mxu0 0.0
    %303 = vmatpush1.msra.mxu0 0.0
    %304 = vmatprep.subr.mxu0 0.0
    %305 = vmatpush1.msra.mxu0 0.0
    %306 = vmatprep.subr.mxu0 0.0
    %307 = vmatpush1.msra.mxu0 0.0
    %308 = vmatprep.subr.mxu0 0.0
    %309 = vmatpush1.msra.mxu0 0.0
    %310 = vmatprep.subr.mxu0 0.0
    %311 = vmatpush1.msra.mxu0 0.0
    %312 = vmatprep.subr.mxu0 0.0
    %313 = vmatpush1.msra.mxu0 0.0
    %314 = vmatprep.subr.mxu0 0.0
    %315 = vmatpush1.msra.mxu0 0.0
    %316 = vmatprep.subr.mxu0 0.0
    %317 = vmatpush1.msra.mxu0 0.0
    %318 = vmatprep.subr.mxu0 0.0
    %319 = vmatpush1.msra.mxu0 0.0
    %320 = vmatprep.subr.mxu0 0.0
    %321 = vmatpush1.msra.mxu0 0.0
    %322 = vmatprep.subr.mxu0 0.0
    %323 = vmatpush1.msra.mxu0 0.0
    %324 = vmatprep.subr.mxu0 0.0
    %325 = vmatpush1.msra.mxu0 0.0
    %326 = vmatprep.subr.mxu0 0.0
    %327 = vmatpush1.msra.mxu0 0.0
    %328 = vmatprep.subr.mxu0 0.0
    %329 = vmatpush1.msra.mxu0 0.0
    %330 = vmatprep.subr.mxu0 0.0
    %331 = vmatpush1.msra.mxu0 0.0
    %332 = vmatprep.subr.mxu0 0.0
    %333 = vmatpush1.msra.mxu0 0.0
    %334 = vmatprep.subr.mxu0 0.0
    %335 = vmatpush1.msra.mxu0 0.0
    %336 = vmatprep.subr.mxu0 0.0
    %337 = vmatpush1.msra.mxu0 0.0
    %338 = vmatprep.subr.mxu0 0.0
    %339 = vmatpush1.msra.mxu0 0.0
    %340 = vmatprep.subr.mxu0 0.0
    %341 = vmatpush1.msra.mxu0 0.0
    %342 = vmatprep.subr.mxu0 0.0
    %343 = vmatpush1.msra.mxu0 0.0
    %344 = vmatprep.subr.mxu0 0.0
    %345 = vmatpush1.msra.mxu0 0.0
    %346 = vmatprep.mubr.f32.mxu0 0.0
    %347 = vmatmul.mubr.f32.gmra.mrb[0].mxu0 %v277
    %v348 = vpop.f32.mrb[0].mxu0
    %v349 = vadd.f32 %v269, %v348
    %v350 = vpop.f32.mrb[0].mxu0
    %351 = vmatprep.mubr.f32.mxu0 0.0
    %352 = vmatmul.mubr.f32.gmra.mrb[0].mxu0 %v280
    %v353 = vpop.f32.mrb[0].mxu0
    %v354 = vadd.f32 %v274, %v353
    %v355 = vpop.f32.mrb[0].mxu0
    %356 = vdwg.mxu0
    %v357 = vand.u32 2147483647, %v349
    %v358 = vand.u32 2147483647, %v354
    %v359 = vsub.f32 0.0, %v357
    %v360 = vsub.f32 0.0, %v358
    %v361 = vmul.f32 %v359, 1.442695
    %v362 = vpow.pop %v361
    %v363 = vmul.f32 %v360, 1.442695
    %v364 = vpow.pop %v363
    %v365 = vadd.f32 %v362, 1.0
    %v366 = vlog2.pop %v365
    %v367 = vmul.f32 %v366, 0.6931472
    %v368 = vmul.f32 -0.5, %v362
    %v369 = vadd.f32 %v368, 1.0
    %v370 = vmul.f32 %v369, %v362
    %v371 = vand.u32 2147483647, %v362
    %vm372 = vcmp.lt.f32.partialorder %v371, 0.0004427343
    %v373 = vsel %vm372, %v370, %v367
    %v374 = vadd.f32 %v364, 1.0
    %v375 = vlog2.pop %v374
    %v376 = vmul.f32 %v375, 0.6931472
    %v377 = vmul.f32 -0.5, %v364
    %v378 = vadd.f32 %v377, 1.0
    %v379 = vmul.f32 %v378, %v364
    %v380 = vand.u32 2147483647, %v364
    %vm381 = vcmp.lt.f32.partialorder %v380, 0.0004427343
    %v382 = vsel %vm381, %v379, %v376
    %v383 = vmax.f32 %v349, 0.0
    %v384 = vmax.f32 %v354, 0.0
    %v385 = vadd.f32 %v373, %v383
    %v386 = vadd.f32 %v382, %v384
    %v387 = vsub.f32 0.0, %v385
    %v388 = vsub.f32 0.0, %v386
    %v389 = vmul.f32 %v254, %v387
    %v390 = vmul.f32 %v259, %v388
    %391 = vst [vmem:[#allocation2] sm:$0xff] %v389
    %392 = vst [vmem:[#allocation2 + $0x8] sm:$0x7f] %v390
    %v393 = vmul.f32 %v387, -0.5
    %v394 = vmul.f32 %v388, -0.5
    %v395 = vrsqrt.pop %v393
    %v396 = vmul.f32 %v393, %v395
    %vm397 = vcmp.eq.f32.partialorder %v393, inf
    %v398 = vsel %vm397, %v393, %v396
    %vm399 = vcmp.eq.f32.partialorder %v393, 0.0
    %v400 = vand.u32 %v393, 2147483648
    %v401 = vsel %vm399, %v400, %v398
    %v402 = vrsqrt.pop %v394
    %v403 = vmul.f32 %v394, %v402
    %vm404 = vcmp.eq.f32.partialorder %v394, inf
    %v405 = vsel %vm404, %v394, %v403
    %vm406 = vcmp.eq.f32.partialorder %v394, 0.0
    %v407 = vand.u32 %v394, 2147483648
    %v408 = vsel %vm406, %v407, %v405
    %409 = vst [vmem:[#allocation4] sm:$0xff] %v401
    %410 = vst [vmem:[#allocation4 + $0x8] sm:$0x7f] %v408
    // Predicated region
    $region30: #{tpu_custom_call.1} parent=1 // pred_check
      _
    $region31: #{tpu_custom_call.1} parent=1 // pred_check_branch
      %412 = sbr.rel (0) target = $region33
    $region32: #{tpu_custom_call.1} parent=1 // pred_region
      %s414 = ssub.s32 256, 256
      %415 = vsyncadd [#allocation3], %s414
      %s416 = sshll.u32 [#allocation2], 4
      %s417 = int_to_ptr.vmem [resolvable:$true] %s416
      %422 = dma.vmem_to_hbm [thread:$0]  %s417, 256, %s7, [#allocation3], 128, 128, 8
    $region33: #{tpu_custom_call.1} parent=1 // pred_fallthru
      _
    // Predicated region
    $region34: #{tpu_custom_call.1} parent=1 // pred_check
      _
    $region35: #{tpu_custom_call.1} parent=1 // pred_check_branch
      %424 = sbr.rel (0) target = $region37
    $region36: #{tpu_custom_call.1} parent=1 // pred_region
      %s426 = ssub.s32 256, 256
      %427 = vsyncadd [#allocation5], %s426
      %s428 = sshll.u32 [#allocation4], 4
      %s429 = int_to_ptr.vmem [resolvable:$true] %s428
      %434 = dma.vmem_to_hbm [thread:$0]  %s429, 256, %s8, [#allocation5], 128, 128, 8
    $region37: #{tpu_custom_call.1} parent=1 // pred_fallthru
      _
    // Predicated region
    $region38: #{tpu_custom_call.1} parent=1 // pred_check
      _
    $region39: #{tpu_custom_call.1} parent=1 // pred_check_branch
      %436 = sbr.rel (0) target = $region41
    $region40: #{tpu_custom_call.1} parent=1 // pred_region
      %437 = dma.done [#allocation3], 256
    $region41: #{tpu_custom_call.1} parent=1 // pred_fallthru
      _
    // Predicated region
    $region42: #{tpu_custom_call.1} parent=1 // pred_check
      _
    $region43: #{tpu_custom_call.1} parent=1 // pred_check_branch
      %439 = sbr.rel (0) target = $region45
    $region44: #{tpu_custom_call.1} parent=1 // pred_region
      %440 = dma.done [#allocation5], 256
    $region45: #{tpu_custom_call.1} parent=1 // pred_fallthru
      _
    %441 = vsyncpa [#allocation3], 1
    %442 = vsyncpa [#allocation5], 1

</llo_original>
